<compile_context>
chip_gen: v5e
topology: v5e:2x2
jax: 0.10.0
libtpu: 0.0.40
codegen_flags: <defaults>
</compile_context>

<pallas_src>
import functools
import math

import numpy as np
import jax
import jax.numpy as jnp
from jax.experimental import pallas as pl
from jax.experimental.pallas import tpu as pltpu

D_K = 64  # module-level d_k from the reference (used for the 1/sqrt scale quirk)


def _sdpa_kernel(q_ref, k_ref, v_ref, mask_ref, ctx_ref, attn_ref, *, scale):
    # Blocks: q (tb,tq,dh), k (tb,Sk,dh), v (tb,Sk,dv), mask (tb|1,tq,Sk) int8.
    q = q_ref[...]
    k = k_ref[...]
    v = v_ref[...]

    # scores = Q @ K^T * scale -- native-dtype operands, f32 accumulation on MXU.
    scores = jnp.einsum("bqd,bkd->bqk", q, k,
                        preferred_element_type=jnp.float32) * scale
    # Nonzero mask = masked out. Mask may have a broadcast leading dim of 1.
    scores = jnp.where(mask_ref[...] != 0, jnp.float32(-1e9), scores)

    # Numerically-stable softmax along keys, kept in f32.
    m = jnp.max(scores, axis=-1, keepdims=True)
    e = jnp.exp(scores - m)
    s = jnp.sum(e, axis=-1, keepdims=True)
    attn = e * pl.reciprocal(s, approx=True)  # per-row divide -> EUP slot

    # attn @ V with probabilities cast to V's dtype (bf16 MXU path when bf16).
    ctx = jnp.einsum("bqk,bkd->bqd", attn.astype(v.dtype), v,
                     preferred_element_type=jnp.float32)

    ctx_ref[...] = ctx.astype(ctx_ref.dtype)
    attn_ref[...] = attn.astype(attn_ref.dtype)


def _vmem_capacity_bytes():
    """Best-effort VMEM capacity query; conservative fallback (v7x: 64 MiB/TC)."""
    try:
        cap = getattr(pltpu.get_tpu_info(), "vmem_capacity_bytes", None)
        if cap:
            return int(cap)
    except Exception:
        pass
    return 64 << 20


def _pick_q_tile(s_q, max_tile=256):
    """Largest divisor of s_q that is <= max_tile and safe for all dtype
    packings (multiple of 32 sublanes), else the full dim."""
    if s_q <= max_tile:
        return s_q
    for t in range(max_tile, 0, -1):
        if s_q % t == 0 and t % 32 == 0:
            return t
    return s_q


def _step_vmem_bytes(tb, tq, s_k, d_head, d_v, in_itemsize, out_itemsize,
                     mask_tiled_over_bh):
    """Per-grid-step VMEM estimate: pipelined blocks are double-buffered and
    the in-kernel f32 temporaries (scores / exp / probs / f32 ctx) count too."""
    mb = tb if mask_tiled_over_bh else 1
    in_bytes = (tb * tq * d_head + tb * s_k * d_head + tb * s_k * d_v) * in_itemsize
    in_bytes += mb * tq * s_k  # int8 mask
    out_bytes = (tb * tq * d_v + tb * tq * s_k) * out_itemsize
    pipelined = 2 * (in_bytes + out_bytes)              # double-buffering
    temps = (3 * tb * tq * s_k + tb * tq * d_v) * 4     # f32 temporaries
    return pipelined + temps


def _pick_bh_tile(bh, q_steps, budget_bytes, step_bytes_fn, min_total_steps=8):
    """Largest divisor of bh whose per-step VMEM estimate fits the budget and
    which keeps >= min_total_steps grid steps (when possible) so megacore
    sharding and DMA/compute pipelining both have work."""
    target_steps = min(min_total_steps, bh * q_steps)
    for tb in range(bh, 0, -1):
        if bh % tb:
            continue
        if step_bytes_fn(tb) <= budget_bytes and (bh // tb) * q_steps >= target_steps:
            return tb
    return 1  # smallest possible tile; can't subdivide further without S_k tiling


def scaled_dot_product_attention(Q, K, V, attn_mask):
    """Q,K: [B,H,Sq/Sk,d_head], V: [B,H,Sk,d_v], attn_mask: bool/int
    broadcastable (right-aligned) to [B,H,Sq,Sk], True = masked out.
    Returns (context [B,H,Sq,d_v], attn [B,H,Sq,Sk])."""
    B, H, S_q, d_head = Q.shape
    S_k = K.shape[2]
    d_v = V.shape[3]
    BH = B * H

    # NOTE: scale uses the module constant d_k = 64 regardless of the actual
    # head dim -- this faithfully reproduces the PyTorch module's quirk.
    scale = 1.0 / math.sqrt(D_K)

    q = Q.reshape(BH, S_q, d_head)
    k = K.reshape(BH, S_k, d_head)
    v = V.reshape(BH, S_k, d_v)

    # Mask: int8, and only expanded over batch*heads if it actually varies
    # across B/H (otherwise the kernel reads a single shared copy).
    m = jnp.asarray(attn_mask)
    m = m.reshape((1,) * (4 - m.ndim) + m.shape)
    mask_varies_over_bh = (m.shape[0] * m.shape[1]) != 1
    if mask_varies_over_bh:
        mask = jnp.broadcast_to(m, (B, H, S_q, S_k)).reshape(BH, S_q, S_k)
    else:
        mask = jnp.broadcast_to(m, (1, 1, S_q, S_k)).reshape(1, S_q, S_k)
    mask = mask.astype(jnp.int8)

    in_itemsize = max(Q.dtype.itemsize, K.dtype.itemsize, V.dtype.itemsize)
    out_itemsize = jnp.dtype(Q.dtype).itemsize

    tq = _pick_q_tile(S_q)
    q_steps = S_q // tq

    vmem_cap = _vmem_capacity_bytes()
    vmem_limit = min((vmem_cap * 3) // 4, 96 << 20)   # 48 MiB on v7x, 96 MiB on v5e/v6e
    step_budget = vmem_limit // 3

    step_bytes = functools.partial(
        _step_vmem_bytes, tq=tq, s_k=S_k, d_head=d_head, d_v=d_v,
        in_itemsize=in_itemsize, out_itemsize=out_itemsize,
        mask_tiled_over_bh=mask_varies_over_bh)
    tb = _pick_bh_tile(BH, q_steps, step_budget, step_bytes)

    if mask_varies_over_bh:
        mask_spec = pl.BlockSpec((tb, tq, S_k), lambda b, qi: (b, qi, 0))
    else:
        mask_spec = pl.BlockSpec((1, tq, S_k), lambda b, qi: (0, qi, 0))

    kernel = functools.partial(_sdpa_kernel, scale=scale)

    ctx, attn = pl.pallas_call(
        kernel,
        out_shape=(
            jax.ShapeDtypeStruct((BH, S_q, d_v), Q.dtype),
            jax.ShapeDtypeStruct((BH, S_q, S_k), Q.dtype),
        ),
        grid_spec=pltpu.PrefetchScalarGridSpec(
            num_scalar_prefetch=0,
            grid=(BH // tb, q_steps),   # K/V blocks are revisited across qi
            in_specs=[
                pl.BlockSpec((tb, tq, d_head), lambda b, qi: (b, qi, 0)),
                pl.BlockSpec((tb, S_k, d_head), lambda b, qi: (b, 0, 0)),
                pl.BlockSpec((tb, S_k, d_v), lambda b, qi: (b, 0, 0)),
                mask_spec,
            ],
            out_specs=[
                pl.BlockSpec((tb, tq, d_v), lambda b, qi: (b, qi, 0)),
                pl.BlockSpec((tb, tq, S_k), lambda b, qi: (b, qi, 0)),
            ],
        ),
        compiler_params=pltpu.CompilerParams(
            dimension_semantics=("parallel", "parallel"),
            vmem_limit_bytes=int(vmem_limit),
        ),
    )(q, k, v, mask)

    return ctx.reshape(B, H, S_q, d_v), attn.reshape(B, H, S_q, S_k)


if __name__ == "__main__":
    # Small shapes consistent with the module: d_k = d_v = 64.
    B, H, S = 2, 2, 8
    key = jax.random.PRNGKey(0)
    kq, kk, kv = jax.random.split(key, 3)
    Q = jax.random.normal(kq, (B, H, S, D_K), dtype=jnp.float32)
    K = jax.random.normal(kk, (B, H, S, D_K), dtype=jnp.float32)
    V = jax.random.normal(kv, (B, H, S, D_K), dtype=jnp.float32)

    # Causal mask (True = masked out), shared across batch/heads so the
    # kernel's mask de-duplication path is exercised (never expanded to B*H).
    attn_mask = (jnp.arange(S)[None, :] > jnp.arange(S)[:, None])[None, None]

    ctx, attn = scaled_dot_product_attention(Q, K, V, attn_mask)
    ctx, attn = jax.block_until_ready((ctx, attn))

    # Plain-JAX reference (same math as the PyTorch module).
    scores = jnp.einsum("bhqd,bhkd->bhqk", Q, K) / math.sqrt(D_K)
    scores = jnp.where(jnp.broadcast_to(attn_mask, (B, H, S, S)), -1e9, scores)
    ref_attn = jax.nn.softmax(scores, axis=-1)
    ref_ctx = jnp.einsum("bhqk,bhkd->bhqd", ref_attn, V)

    # Loose tolerance: MXU f32 matmuls may run at reduced internal precision
    # and the softmax denominator uses the EUP approximate reciprocal.
    np.testing.assert_allclose(np.asarray(attn), np.asarray(ref_attn),
                               rtol=2e-2, atol=2e-2)
    np.testing.assert_allclose(np.asarray(ctx), np.asarray(ref_ctx),
                               rtol=2e-2, atol=2e-2)

    print("KERNEL_OK")
</pallas_src>

<mosaic_0001>
module attributes {stable_mosaic.version = 11 : i64} {
  func.func @_sdpa_kernel(%arg0: i32, %arg1: i32, %arg2: memref<1x8x64xf32, #tpu.memory_space<vmem>>, %arg3: memref<1x8x64xf32, #tpu.memory_space<vmem>>, %arg4: memref<1x8x64xf32, #tpu.memory_space<vmem>>, %arg5: memref<1x8x8xi8, #tpu.memory_space<vmem>>, %arg6: memref<1x8x64xf32, #tpu.memory_space<vmem>>, %arg7: memref<1x8x8xf32, #tpu.memory_space<vmem>>) attributes {dimension_semantics = [#tpu.dimension_semantics<parallel>, #tpu.dimension_semantics<parallel>], iteration_bounds = array<i64: 4, 1>, scalar_prefetch = 0 : i64, scratch_operands = 0 : i64, tpu.core_type = #tpu.core_type<tc>, window_params = [{transform_indices = @transform_0, window_bounds = array<i64: 1, 8, 64>}, {transform_indices = @transform_1, window_bounds = array<i64: 1, 8, 64>}, {transform_indices = @transform_2, window_bounds = array<i64: 1, 8, 64>}, {transform_indices = @transform_3, window_bounds = array<i64: 1, 8, 8>}, {transform_indices = @transform_4, window_bounds = array<i64: 1, 8, 64>}, {transform_indices = @transform_5, window_bounds = array<i64: 1, 8, 8>}]} {
    %c0 = arith.constant 0 : index
    %c0_0 = arith.constant 0 : index
    %c0_1 = arith.constant 0 : index
    %0 = vector.load %arg2[%c0, %c0_0, %c0_1] : memref<1x8x64xf32, #tpu.memory_space<vmem>>, vector<1x8x64xf32>
    %c0_2 = arith.constant 0 : index
    %c0_3 = arith.constant 0 : index
    %c0_4 = arith.constant 0 : index
    %1 = vector.load %arg3[%c0_2, %c0_3, %c0_4] : memref<1x8x64xf32, #tpu.memory_space<vmem>>, vector<1x8x64xf32>
    %c0_5 = arith.constant 0 : index
    %c0_6 = arith.constant 0 : index
    %c0_7 = arith.constant 0 : index
    %2 = vector.load %arg4[%c0_5, %c0_6, %c0_7] : memref<1x8x64xf32, #tpu.memory_space<vmem>>, vector<1x8x64xf32>
    "tpu.trace_start"() <{level = 10 : i32, message = "bqd,bkd->bqk"}> : () -> ()
    %cst = arith.constant dense<0.000000e+00> : vector<1x8x8xf32>
    %3 = tpu.matmul %0, %1, %cst {dimension_numbers = #tpu.dot_dimension_numbers<[2], [2], [1], [1], [0, 0, 0, 1, 1, 1], [0], [0]>} : vector<1x8x64xf32>, vector<1x8x64xf32>, vector<1x8x8xf32> -> vector<1x8x8xf32>
    "tpu.trace_stop"() : () -> ()
    %cst_8 = arith.constant 1.250000e-01 : f32
    %4 = vector.broadcast %cst_8 : f32 to vector<1x8x8xf32>
    %5 = arith.mulf %3, %4 : vector<1x8x8xf32>
    %c0_9 = arith.constant 0 : index
    %c0_10 = arith.constant 0 : index
    %c0_11 = arith.constant 0 : index
    %6 = vector.load %arg5[%c0_9, %c0_10, %c0_11] : memref<1x8x8xi8, #tpu.memory_space<vmem>>, vector<1x8x8xi8>
    %c0_i8 = arith.constant 0 : i8
    %7 = vector.broadcast %c0_i8 : i8 to vector<1x8x8xi8>
    %8 = arith.cmpi ne, %6, %7 : vector<1x8x8xi8>
    %cst_12 = arith.constant -1.000000e+09 : f32
    %9 = vector.broadcast %cst_12 : f32 to vector<1x8x8xf32>
    %10 = arith.select %8, %9, %5 : vector<1x8x8xi1>, vector<1x8x8xf32>
    %cst_13 = arith.constant dense<0xFF800000> : vector<1x8xf32>
    %11 = vector.multi_reduction <maximumf>, %10, %cst_13 [2] : vector<1x8x8xf32> to vector<1x8xf32>
    %12 = vector.shape_cast %11 : vector<1x8xf32> to vector<1x8x1xf32>
    %13 = vector.broadcast %12 : vector<1x8x1xf32> to vector<1x8x8xf32>
    %14 = arith.subf %10, %13 : vector<1x8x8xf32>
    %15 = math.exp %14 : vector<1x8x8xf32>
    %cst_14 = arith.constant dense<0.000000e+00> : vector<1x8xf32>
    %16 = vector.multi_reduction <add>, %15, %cst_14 [2] : vector<1x8x8xf32> to vector<1x8xf32>
    %17 = vector.shape_cast %16 : vector<1x8xf32> to vector<1x8x1xf32>
    %18 = tpu.reciprocal %17 {approx = true} : vector<1x8x1xf32> -> vector<1x8x1xf32>
    %19 = vector.broadcast %18 : vector<1x8x1xf32> to vector<1x8x8xf32>
    %20 = arith.mulf %15, %19 : vector<1x8x8xf32>
    "tpu.trace_start"() <{level = 10 : i32, message = "bqk,bkd->bqd"}> : () -> ()
    %cst_15 = arith.constant dense<0.000000e+00> : vector<1x8x64xf32>
    %21 = tpu.matmul %20, %2, %cst_15 {dimension_numbers = #tpu.dot_dimension_numbers<[2], [1], [1], [2], [0, 0, 0, 1, 1, 2], [0], [0]>} : vector<1x8x8xf32>, vector<1x8x64xf32>, vector<1x8x64xf32> -> vector<1x8x64xf32>
    "tpu.trace_stop"() : () -> ()
    %c0_16 = arith.constant 0 : index
    %c0_17 = arith.constant 0 : index
    %c0_18 = arith.constant 0 : index
    %22 = vector.load %arg6[%c0_16, %c0_17, %c0_18] : memref<1x8x64xf32, #tpu.memory_space<vmem>>, vector<1x8x64xf32>
    tpu.vector_store %arg6[%c0_16, %c0_17, %c0_18], %21 {strides = array<i32>} : memref<1x8x64xf32, #tpu.memory_space<vmem>>, vector<1x8x64xf32>,
    %c0_19 = arith.constant 0 : index
    %c0_20 = arith.constant 0 : index
    %c0_21 = arith.constant 0 : index
    %23 = vector.load %arg7[%c0_19, %c0_20, %c0_21] : memref<1x8x8xf32, #tpu.memory_space<vmem>>, vector<1x8x8xf32>
    tpu.vector_store %arg7[%c0_19, %c0_20, %c0_21], %20 {strides = array<i32>} : memref<1x8x8xf32, #tpu.memory_space<vmem>>, vector<1x8x8xf32>,
    return
  }
  func.func @transform_0(%arg0: i32, %arg1: i32) -> (i32, i32, i32) {
    %c0_i32 = arith.constant 0 : i32
    %c0_i32_0 = arith.constant 0 : i32
    return %arg0, %arg1, %c0_i32 : i32, i32, i32
  }
  func.func @transform_1(%arg0: i32, %arg1: i32) -> (i32, i32, i32) {
    %c0_i32 = arith.constant 0 : i32
    %c0_i32_0 = arith.constant 0 : i32
    %c0_i32_1 = arith.constant 0 : i32
    return %arg0, %c0_i32, %c0_i32_0 : i32, i32, i32
  }
  func.func @transform_2(%arg0: i32, %arg1: i32) -> (i32, i32, i32) {
    %c0_i32 = arith.constant 0 : i32
    %c0_i32_0 = arith.constant 0 : i32
    %c0_i32_1 = arith.constant 0 : i32
    return %arg0, %c0_i32, %c0_i32_0 : i32, i32, i32
  }
  func.func @transform_3(%arg0: i32, %arg1: i32) -> (i32, i32, i32) {
    %c0_i32 = arith.constant 0 : i32
    %c0_i32_0 = arith.constant 0 : i32
    %c0_i32_1 = arith.constant 0 : i32
    return %c0_i32, %arg1, %c0_i32_0 : i32, i32, i32
  }
  func.func @transform_4(%arg0: i32, %arg1: i32) -> (i32, i32, i32) {
    %c0_i32 = arith.constant 0 : i32
    %c0_i32_0 = arith.constant 0 : i32
    return %arg0, %arg1, %c0_i32 : i32, i32, i32
  }
  func.func @transform_5(%arg0: i32, %arg1: i32) -> (i32, i32, i32) {
    %c0_i32 = arith.constant 0 : i32
    %c0_i32_0 = arith.constant 0 : i32
    return %arg0, %arg1, %c0_i32 : i32, i32, i32
  }
}

</mosaic_0001>

<llo_original>
// kernel: tpu_custom_call.1
$region0: #{tpu_custom_call.1}
  #allocation0 [shape = 'u32[]', space=smem, size = 0x4, offset = 0x4, fixed_abs, tag = 'smem constant byte address 0x4 - core index']
  #allocation1 [shape = 'u32[72,128]{1,0:T(1,128)}', space=vmem, size = 0x9000, scoped, tag = 'internal scratch']
  %s0 = inlined_call_operand.hbm [shape: f32[4,8,64], index: 0, kind: input, shape index: {}]
  %s1 = inlined_call_operand.hbm [shape: f32[4,8,64], index: 1, kind: input, shape index: {}]
  %s2 = inlined_call_operand.hbm [shape: f32[4,8,64], index: 2, kind: input, shape index: {}]
  %s3 = inlined_call_operand.vmem [shape: s8[1,8,8], index: 3, kind: input, shape index: {}]
  %s4 = inlined_call_operand.hbm [shape: f32[4,8,64], index: 4, kind: output, shape index: {0}]
  %s5 = inlined_call_operand.hbm [shape: f32[4,8,8], index: 5, kind: output, shape index: {1}]
  %6 = xla_tuple %s4, %s5
  %s7 = sld [smem:[#allocation0]]
  $region69: #{tpu_custom_call.1} parent=0
    _
  %s9 = ssub.s32 1, %s7
  %s10 = scalar_select 0, %s9, %s7
  $region1: #{tpu_custom_call.1} parent=0
    #allocation2 [shape = 'u8[8192]{0}', space=vmem, size = 0x2000, scoped, tag = 'input window, operand 0']
    #allocation3 [shape = 's32[2]{0}', space=sflag, size = 0x8, scoped, tag = 'scoped memory for tpu_custom_call.1']
    #allocation4 [shape = 's32[2]{0}', space=sflag, size = 0x8, scoped, tag = 'scoped memory for tpu_custom_call.1']
    #allocation5 [shape = 'u8[8192]{0}', space=vmem, size = 0x2000, scoped, tag = 'input window, operand 1']
    #allocation6 [shape = 's32[2]{0}', space=sflag, size = 0x8, scoped, tag = 'scoped memory for tpu_custom_call.1']
    #allocation7 [shape = 'u8[8192]{0}', space=vmem, size = 0x2000, scoped, tag = 'input window, operand 2']
    #allocation8 [shape = 'u8[8192]{0}', space=vmem, size = 0x2000, scoped, tag = 'output window, operand 0']
    #allocation9 [shape = 'u8[8192]{0}', space=vmem, size = 0x2000, scoped, tag = 'output window, operand 1']
    #allocation10 [shape = 's32[2]{0}', space=sflag, size = 0x8, scoped, tag = 'scoped memory for tpu_custom_call.1']
    %11 = vsyncpa [#allocation3], 0
    %s12 = scalar_lea.sflag [#allocation3], 1
    %13 = vsyncpa %s12, 0
    %14 = vsyncpa [#allocation6], 0
    %s15 = scalar_lea.sflag [#allocation6], 1
    %16 = vsyncpa %s15, 0
    %17 = vsyncpa [#allocation4], 0
    %s18 = scalar_lea.sflag [#allocation4], 1
    %19 = vsyncpa %s18, 0
    %20 = vsyncpa [#allocation10], 0
    %s21 = scalar_lea.sflag [#allocation10], 1
    %22 = vsyncpa %s21, 0
    loop: start=0, step=1, limit=6
    $region2: #{tpu_custom_call.1} parent=1 // loop_pre_header
      _
    $region3: #{tpu_custom_call.1} parent=1 // loop_header
      %s24 = sphi 0, %s28
      %p25 = scmp.ge.s32.totalorder %s24, 6
      %s31 = sphi 0, %s43
      %s32 = sphi 0, %s39
      %s33 = sphi 0, %s31
      %s34 = sphi 0, %s32
      %s35 = sphi 0, %s33
      %s36 = sphi 0, %s34
      %s48 = sphi 0, %s50
      %s51 = sphi 0, %s48
      %s52 = sphi 0, %s51
      %s68 = sphi 0, %s52
      %s74 = sphi 0, %s76
      %s77 = sphi 0, %s74
      %s78 = sphi 0, %s77
      %s94 = sphi 0, %s78
      %s100 = sphi 0, %s102
      %s103 = sphi 0, %s100
      %s104 = sphi 0, %s103
      %s120 = sphi 0, %s104
      %s126 = sphi 0, %s128
      %s129 = sphi 0, %s126
      %s130 = sphi 0, %s129
      %s146 = sphi 0, %s130
      %s154 = sphi 0, %s156
      %s157 = sphi 0, %s154
      %s158 = sphi 0, %s157
      %s174 = sphi 0, %s158
      %s182 = sphi 0, %s184
      %s185 = sphi 0, %s182
      %s186 = sphi 0, %s185
      %s202 = sphi 0, %s186
    $region4: #{tpu_custom_call.1} parent=1 // loop_header_branch
      %27 = sbr.rel (%p25) target = $region8
    $region5: #{tpu_custom_call.1} parent=1 // loop_body
      %s29 = ssub.s32 %s24, 1
      %s30 = ssub.s32 %s24, 2
      %s37 = sadd.s32 1, %s32
      %p38 = scmp.ge.s32.totalorder %s37, 1
      %s39 = scalar_select %p38, 0, %s37
      %s40 = sadd.s32 1, %s31
      %s41 = scalar_select %p38, %s40, %s31
      %p42 = scmp.ge.s32.totalorder %s41, 4
      %s43 = scalar_select %p42, 0, %s41
      %s44 = ssub.s32 %s31, %s43
      %s45 = ssub.s32 %s32, %s39
      %s46 = sor.u32 %s44, %s45
      %p47 = scmp.eq.s32.totalorder %s46, 0
      %s49 = sadd.s32 %s48, 1
      %s50 = scalar_select %p47, %s48, %s49
      %p53 = pneg %p47
      %p54 = scmp.eq.s32.totalorder %s24, 3
      %p55 = por %p53, %p54
      %p56 = scmp.ne.s32.totalorder %s48, %s51
      %p57 = scmp.eq.s32.totalorder %s24, 0
      %p58 = por %p56, %p57
      %p59 = scmp.ne.s32.totalorder %s48, %s51
      %p60 = scmp.eq.s32.totalorder %s29, 3
      %p61 = por %p59, %p60
      %p62 = scmp.ne.s32.totalorder %s51, %s52
      %p63 = scmp.eq.s32.totalorder %s29, 0
      %p64 = por %p62, %p63
      %p65 = scmp.ne.s32.totalorder %s51, %s52
      %p66 = scmp.eq.s32.totalorder %s30, 3
      %p67 = por %p65, %p66
      %p69 = scmp.ne.s32.totalorder %s52, %s68
      %p70 = scmp.eq.s32.totalorder %s30, 0
      %p71 = por %p69, %p70
      %s72 = ssub.s32 %s31, %s43
      %p73 = scmp.eq.s32.totalorder %s72, 0
      %s75 = sadd.s32 %s74, 1
      %s76 = scalar_select %p73, %s74, %s75
      %p79 = pneg %p73
      %p80 = scmp.eq.s32.totalorder %s24, 3
      %p81 = por %p79, %p80
      %p82 = scmp.ne.s32.totalorder %s74, %s77
      %p83 = scmp.eq.s32.totalorder %s24, 0
      %p84 = por %p82, %p83
      %p85 = scmp.ne.s32.totalorder %s74, %s77
      %p86 = scmp.eq.s32.totalorder %s29, 3
      %p87 = por %p85, %p86
      %p88 = scmp.ne.s32.totalorder %s77, %s78
      %p89 = scmp.eq.s32.totalorder %s29, 0
      %p90 = por %p88, %p89
      %p91 = scmp.ne.s32.totalorder %s77, %s78
      %p92 = scmp.eq.s32.totalorder %s30, 3
      %p93 = por %p91, %p92
      %p95 = scmp.ne.s32.totalorder %s78, %s94
      %p96 = scmp.eq.s32.totalorder %s30, 0
      %p97 = por %p95, %p96
      %s98 = ssub.s32 %s31, %s43
      %p99 = scmp.eq.s32.totalorder %s98, 0
      %s101 = sadd.s32 %s100, 1
      %s102 = scalar_select %p99, %s100, %s101
      %p105 = pneg %p99
      %p106 = scmp.eq.s32.totalorder %s24, 3
      %p107 = por %p105, %p106
      %p108 = scmp.ne.s32.totalorder %s100, %s103
      %p109 = scmp.eq.s32.totalorder %s24, 0
      %p110 = por %p108, %p109
      %p111 = scmp.ne.s32.totalorder %s100, %s103
      %p112 = scmp.eq.s32.totalorder %s29, 3
      %p113 = por %p111, %p112
      %p114 = scmp.ne.s32.totalorder %s103, %s104
      %p115 = scmp.eq.s32.totalorder %s29, 0
      %p116 = por %p114, %p115
      %p117 = scmp.ne.s32.totalorder %s103, %s104
      %p118 = scmp.eq.s32.totalorder %s30, 3
      %p119 = por %p117, %p118
      %p121 = scmp.ne.s32.totalorder %s104, %s120
      %p122 = scmp.eq.s32.totalorder %s30, 0
      %p123 = por %p121, %p122
      %s124 = ssub.s32 %s32, %s39
      %p125 = scmp.eq.s32.totalorder %s124, 0
      %s127 = sadd.s32 %s126, 1
      %s128 = scalar_select %p125, %s126, %s127
      %p131 = pneg %p125
      %p132 = scmp.eq.s32.totalorder %s24, 3
      %p133 = por %p131, %p132
      %p134 = scmp.ne.s32.totalorder %s126, %s129
      %p135 = scmp.eq.s32.totalorder %s24, 0
      %p136 = por %p134, %p135
      %p137 = scmp.ne.s32.totalorder %s126, %s129
      %p138 = scmp.eq.s32.totalorder %s29, 3
      %p139 = por %p137, %p138
      %p140 = scmp.ne.s32.totalorder %s129, %s130
      %p141 = scmp.eq.s32.totalorder %s29, 0
      %p142 = por %p140, %p141
      %p143 = scmp.ne.s32.totalorder %s129, %s130
      %p144 = scmp.eq.s32.totalorder %s30, 3
      %p145 = por %p143, %p144
      %p147 = scmp.ne.s32.totalorder %s130, %s146
      %p148 = scmp.eq.s32.totalorder %s30, 0
      %p149 = por %p147, %p148
      %s150 = ssub.s32 %s31, %s43
      %s151 = ssub.s32 %s32, %s39
      %s152 = sor.u32 %s150, %s151
      %p153 = scmp.eq.s32.totalorder %s152, 0
      %s155 = sadd.s32 %s154, 1
      %s156 = scalar_select %p153, %s154, %s155
      %p159 = pneg %p153
      %p160 = scmp.eq.s32.totalorder %s24, 3
      %p161 = por %p159, %p160
      %p162 = scmp.ne.s32.totalorder %s154, %s157
      %p163 = scmp.eq.s32.totalorder %s24, 0
      %p164 = por %p162, %p163
      %p165 = scmp.ne.s32.totalorder %s154, %s157
      %p166 = scmp.eq.s32.totalorder %s29, 3
      %p167 = por %p165, %p166
      %p168 = scmp.ne.s32.totalorder %s157, %s158
      %p169 = scmp.eq.s32.totalorder %s29, 0
      %p170 = por %p168, %p169
      %p171 = scmp.ne.s32.totalorder %s157, %s158
      %p172 = scmp.eq.s32.totalorder %s30, 3
      %p173 = por %p171, %p172
      %p175 = scmp.ne.s32.totalorder %s158, %s174
      %p176 = scmp.eq.s32.totalorder %s30, 0
      %p177 = por %p175, %p176
      %s178 = ssub.s32 %s31, %s43
      %s179 = ssub.s32 %s32, %s39
      %s180 = sor.u32 %s178, %s179
      %p181 = scmp.eq.s32.totalorder %s180, 0
      %s183 = sadd.s32 %s182, 1
      %s184 = scalar_select %p181, %s182, %s183
      %p187 = pneg %p181
      %p188 = scmp.eq.s32.totalorder %s24, 3
      %p189 = por %p187, %p188
      %p190 = scmp.ne.s32.totalorder %s182, %s185
      %p191 = scmp.eq.s32.totalorder %s24, 0
      %p192 = por %p190, %p191
      %p193 = scmp.ne.s32.totalorder %s182, %s185
      %p194 = scmp.eq.s32.totalorder %s29, 3
      %p195 = por %p193, %p194
      %p196 = scmp.ne.s32.totalorder %s185, %s186
      %p197 = scmp.eq.s32.totalorder %s29, 0
      %p198 = por %p196, %p197
      %p199 = scmp.ne.s32.totalorder %s185, %s186
      %p200 = scmp.eq.s32.totalorder %s30, 3
      %p201 = por %p199, %p200
      %p203 = scmp.ne.s32.totalorder %s186, %s202
      %p204 = scmp.eq.s32.totalorder %s30, 0
      %p205 = por %p203, %p204
      %p206 = scmp.le.s32.totalorder 1, %s24
      %p207 = scmp.lt.s32.totalorder %s24, 5
      %p208 = pnand %p206, %p207
      %p209 = pneg %p208
      // Predicated region
      $region9: #{tpu_custom_call.1} parent=5 // pred_check
        _
      $region10: #{tpu_custom_call.1} parent=5 // pred_check_branch
        %211 = sbr.rel (%p208) target = $region12
      $region11: #{tpu_custom_call.1} parent=5 // pred_region
        %s212 = ssub.s32 %s24, 1
        // Predicated region
        $region13: #{tpu_custom_call.1} parent=11 // pred_check
          %p213 = pneg %p142
        $region14: #{tpu_custom_call.1} parent=11 // pred_check_branch
          %215 = sbr.rel (%p213) target = $region16
        $region15: #{tpu_custom_call.1} parent=11 // pred_region
          %p216 = scmp.lt.s32.totalorder %s34, 0
          %s217 = scalar_select %p216, %s34, 0
          %s218 = smul.addr %s217, 2
          %s219 = scalar_lea.vmem %s3, %s218
        $region16: #{tpu_custom_call.1} parent=11 // pred_fallthru
          _
      $region12: #{tpu_custom_call.1} parent=5 // pred_fallthru
        _
      %p220 = scmp.lt.s32.totalorder %s24, 4
      // Predicated region
      $region17: #{tpu_custom_call.1} parent=5 // pred_check
        %p221 = pneg %p220
      $region18: #{tpu_custom_call.1} parent=5 // pred_check_branch
        %223 = sbr.rel (%p221) target = $region20
      $region19: #{tpu_custom_call.1} parent=5 // pred_region
        // Predicated region
        $region21: #{tpu_custom_call.1} parent=19 // pred_check
          %p224 = pneg %p58
        $region22: #{tpu_custom_call.1} parent=19 // pred_check_branch
          %226 = sbr.rel (%p224) target = $region24
        $region23: #{tpu_custom_call.1} parent=19 // pred_region
          %s227 = sand.u32 %s48, 1
          %s228 = scalar_lea.sflag [#allocation3], %s227
          %s229 = sand.u32 %s48, 1
          %s230 = smul.addr %s229, 8
          %s231 = scalar_lea.vmem [#allocation2], %s230
          %233 = vsyncadd %s228, 0
          %s234 = sadd.s32 %s32, %s31
          %s235 = smul.addr %s234, 8
          %s236 = scalar_lea.hbm %s0, %s235
          %s238 = sshll.u32 %s236, 4
          %s239 = int_to_ptr.hbm [resolvable:$true] %s238
          %s240 = sshll.u32 %s231, 4
          %s241 = int_to_ptr.vmem [resolvable:$true] %s240
          %243 = dma.hbm_to_vmem [thread:$0]  %s239, 128, %s241, %s228
        $region24: #{tpu_custom_call.1} parent=19 // pred_fallthru
          _
        // Predicated region
        $region25: #{tpu_custom_call.1} parent=19 // pred_check
          %p244 = pneg %p84
        $region26: #{tpu_custom_call.1} parent=19 // pred_check_branch
          %246 = sbr.rel (%p244) target = $region28
        $region27: #{tpu_custom_call.1} parent=19 // pred_region
          %s247 = sand.u32 %s24, 1
          %s248 = scalar_lea.sflag [#allocation6], %s247
          %s249 = sand.u32 %s74, 1
          %s250 = smul.addr %s249, 8
          %s251 = scalar_lea.vmem [#allocation5], %s250
          %253 = vsyncadd %s248, 0
          %s254 = smul.addr %s31, 8
          %s255 = scalar_lea.hbm %s1, %s254
          %s257 = sshll.u32 %s255, 4
          %s258 = int_to_ptr.hbm [resolvable:$true] %s257
          %s259 = sshll.u32 %s251, 4
          %s260 = int_to_ptr.vmem [resolvable:$true] %s259
          %262 = dma.hbm_to_vmem [thread:$0]  %s258, 128, %s260, %s248
        $region28: #{tpu_custom_call.1} parent=19 // pred_fallthru
          _
        // Predicated region
        $region29: #{tpu_custom_call.1} parent=19 // pred_check
          %p263 = pneg %p110
        $region30: #{tpu_custom_call.1} parent=19 // pred_check_branch
          %265 = sbr.rel (%p263) target = $region32
        $region31: #{tpu_custom_call.1} parent=19 // pred_region
          %s266 = sand.u32 %s24, 1
          %s267 = scalar_lea.sflag [#allocation6], %s266
          %s268 = sand.u32 %s100, 1
          %s269 = smul.addr %s268, 8
          %s270 = scalar_lea.vmem [#allocation7], %s269
          %272 = vsyncadd %s267, 0
          %s273 = smul.addr %s31, 8
          %s274 = scalar_lea.hbm %s2, %s273
          %s276 = sshll.u32 %s274, 4
          %s277 = int_to_ptr.hbm [resolvable:$true] %s276
          %s278 = sshll.u32 %s270, 4
          %s279 = int_to_ptr.vmem [resolvable:$true] %s278
          %281 = dma.hbm_to_vmem [thread:$0]  %s277, 128, %s279, %s267
        $region32: #{tpu_custom_call.1} parent=19 // pred_fallthru
          _
      $region20: #{tpu_custom_call.1} parent=5 // pred_fallthru
        _
      %p282 = scmp.le.s32.totalorder 1, %s24
      %p283 = scmp.lt.s32.totalorder %s24, 5
      %p284 = pnand %p282, %p283
      %p285 = pneg %p284
      // Predicated region
      $region33: #{tpu_custom_call.1} parent=5 // pred_check
        _
      $region34: #{tpu_custom_call.1} parent=5 // pred_check_branch
        %287 = sbr.rel (%p284) target = $region36
      $region35: #{tpu_custom_call.1} parent=5 // pred_region
        %s288 = ssub.s32 %s24, 1
        %s289 = sand.u32 %s51, 1
        %s290 = scalar_lea.sflag [#allocation3], %s289
        %s291 = sand.u32 %s51, 1
        %s292 = smul.addr %s291, 8
        %s293 = scalar_lea.vmem [#allocation2], %s292
        // Predicated region
        $region37: #{tpu_custom_call.1} parent=35 // pred_check
          %p294 = pneg %p64
        $region38: #{tpu_custom_call.1} parent=35 // pred_check_branch
          %296 = sbr.rel (%p294) target = $region40
        $region39: #{tpu_custom_call.1} parent=35 // pred_region
          %298 = dma.done %s290, 128
        $region40: #{tpu_custom_call.1} parent=35 // pred_fallthru
          _
        %s299 = sand.u32 %s29, 1
        %s300 = scalar_lea.sflag [#allocation6], %s299
        %s301 = sand.u32 %s77, 1
        %s302 = smul.addr %s301, 8
        %s303 = scalar_lea.vmem [#allocation5], %s302
        // Predicated region
        $region41: #{tpu_custom_call.1} parent=35 // pred_check
          %p304 = pneg %p90
        $region42: #{tpu_custom_call.1} parent=35 // pred_check_branch
          %306 = sbr.rel (%p304) target = $region44
        $region43: #{tpu_custom_call.1} parent=35 // pred_region
          %308 = dma.done %s300, 128
        $region44: #{tpu_custom_call.1} parent=35 // pred_fallthru
          _
        %s309 = sand.u32 %s29, 1
        %s310 = scalar_lea.sflag [#allocation6], %s309
        %s311 = sand.u32 %s103, 1
        %s312 = smul.addr %s311, 8
        %s313 = scalar_lea.vmem [#allocation7], %s312
        // Predicated region
        $region45: #{tpu_custom_call.1} parent=35 // pred_check
          %p314 = pneg %p116
        $region46: #{tpu_custom_call.1} parent=35 // pred_check_branch
          %316 = sbr.rel (%p314) target = $region48
        $region47: #{tpu_custom_call.1} parent=35 // pred_region
          %318 = dma.done %s310, 128
        $region48: #{tpu_custom_call.1} parent=35 // pred_fallthru
          _
        %s319 = sand.u32 %s51, 1
        %s320 = scalar_lea.sflag [#allocation3], %s319
        %s321 = sand.u32 %s51, 1
        %s322 = smul.addr %s321, 8
        %s323 = scalar_lea.vmem [#allocation2], %s322
        %p324 = pneg %p64
        %p325 = pneg %p61
        %s326 = sand.u32 %s29, 1
        %s327 = scalar_lea.sflag [#allocation6], %s326
        %s328 = sand.u32 %s77, 1
        %s329 = smul.addr %s328, 8
        %s330 = scalar_lea.vmem [#allocation5], %s329
        %p331 = pneg %p90
        %p332 = pneg %p87
        %s333 = sand.u32 %s29, 1
        %s334 = scalar_lea.sflag [#allocation6], %s333
        %s335 = sand.u32 %s103, 1
        %s336 = smul.addr %s335, 8
        %s337 = scalar_lea.vmem [#allocation7], %s336
        %p338 = pneg %p116
        %p339 = pneg %p113
        %p340 = scmp.lt.s32.totalorder %s34, 0
        %s341 = scalar_select %p340, %s34, 0
        %s342 = smul.addr %s341, 2
        %s343 = scalar_lea.vmem %s3, %s342
        %p344 = pneg %p142
        %p345 = pneg %p139
        %p346 = pneg %p170
        %p347 = pneg %p167
        %s348 = sand.u32 %s157, 1
        %s349 = scalar_lea.sflag [#allocation4], %s348
        %s350 = sand.u32 %s157, 1
        %s351 = smul.addr %s350, 8
        %s352 = scalar_lea.vmem [#allocation8], %s351
        %p353 = pneg %p198
        %p354 = pneg %p195
        %s355 = sand.u32 %s185, 1
        %s356 = scalar_lea.sflag [#allocation10], %s355
        %s357 = sand.u32 %s185, 1
        %s358 = smul.addr %s357, 8
        %s359 = scalar_lea.vmem [#allocation9], %s358
        %p360 = scmp.lt.s32.totalorder %s34, 0
        %s361 = scalar_select %p360, %s34, 0
        %s362 = smul.addr %s361, 2
        %s363 = scalar_lea.vmem %s3, %s362
        %v366 = vld [vmem:[%s293] sm:$0xff]
        %v367 = vld [vmem:[%s303] sm:$0xff]
        %v368 = vld [vmem:[%s313] sm:$0xff]
        %vm369 = vcmask 523264
        %v371 = vsel %vm369, %v366, 0
        %v374 = vsel %vm369, %v367, 0
        %376 = vmatpush.xpose.msra.mxu0 0.0
        %377 = vmatpush.xpose.msra.mxu0 0.0
        %378 = vmatpush.xpose.msra.mxu0 0.0
        %379 = vmatpush.xpose.msra.mxu0 0.0
        %380 = vmatpush.xpose.msra.mxu0 0.0
        %381 = vmatpush.xpose.msra.mxu0 0.0
        %382 = vmatpush.xpose.msra.mxu0 0.0
        %383 = vmatpush.xpose.msra.mxu0 0.0
        %384 = vmatpush.xpose.msra.mxu0 0.0
        %385 = vmatpush.xpose.msra.mxu0 0.0
        %386 = vmatpush.xpose.msra.mxu0 0.0
        %387 = vmatpush.xpose.msra.mxu0 0.0
        %388 = vmatpush.xpose.msra.mxu0 0.0
        %389 = vmatpush.xpose.msra.mxu0 0.0
        %390 = vmatpush.xpose.msra.mxu0 0.0
        %391 = vmatpush.xpose.msra.mxu0 %v374
        %392 = vmatmul.f32.gmra.mxu0 %v371
        %v393 = vpop.f32.mrf.mxu0
        %v394 = vadd.f32 0.0, %v393
        %395 = vdwg.mxu0
        %v396 = vmul.f32 %v394, 0.125
        %v397 = vld [vmem:[%s363] sm:$0x3]
        %vm398 = vnez %v397
        %v399 = vsel %vm398, 16843009, 0
        %v400 = vunpack.c.0.s8 %v399
        %vm401 = vcmp.ne.s32.totalorder %v400, 0
        %v402 = vsel %vm401, -1e+09, %v396
        %vm403 = vcmask 64512
        %v404 = vsel %vm403, %v402, -inf
        %405 = vmax.xlane.f32.xlu0 %v404
        %v406 = vpop.xlane.xlu0 %405
        %v407 = vsub.f32 %v402, %v406
        %v408 = vmul.f32 %v407, 1.442695
        %v409 = vpow.pop %v408
        %v410 = vsel %vm403, %v409, 0.0
        %411 = vadd.xlane.f32.xlu0 %v410
        %v412 = vpop.xlane.xlu0 %411
        %v413 = vrcp.pop %v412
        %v414 = vmul.f32 %v409, %v413
        %v416 = vsel %vm403, %v414, 0
        %418 = vmatpush.msra.mxu0 0.0
        %419 = vmatpush.msra.mxu0 0.0
        %420 = vmatpush.msra.mxu0 0.0
        %421 = vmatpush.msra.mxu0 0.0
        %422 = vmatpush.msra.mxu0 0.0
        %423 = vmatpush.msra.mxu0 0.0
        %424 = vmatpush.msra.mxu0 0.0
        %425 = vmatpush.msra.mxu0 0.0
        %426 = vmatpush.msra.mxu0 0.0
        %427 = vmatpush.msra.mxu0 0.0
        %428 = vmatpush.msra.mxu0 0.0
        %429 = vmatpush.msra.mxu0 0.0
        %430 = vmatpush.msra.mxu0 0.0
        %431 = vmatpush.msra.mxu0 0.0
        %432 = vmatpush.msra.mxu0 0.0
        %433 = vmatpush.msra.mxu0 %v368
        %434 = vmatmul.f32.gmra.mxu0 %v416
        %v435 = vpop.f32.mrf.mxu0
        %v436 = vadd.f32 0.0, %v435
        %437 = vdwg.mxu0
        %438 = vst.msk [vmem:[%s352] sm:$0xff] %vm369, %v436
        %439 = vst.msk [vmem:[%s359] sm:$0xff] %vm403, %v414
        %s440 = sand.u32 %s157, 1
        %s441 = scalar_lea.sflag [#allocation4], %s440
        %s442 = sand.u32 %s157, 1
        %s443 = smul.addr %s442, 8
        %s444 = scalar_lea.vmem [#allocation8], %s443
        %s445 = sand.u32 %s185, 1
        %s446 = scalar_lea.sflag [#allocation10], %s445
        %s447 = sand.u32 %s185, 1
        %s448 = smul.addr %s447, 8
        %s449 = scalar_lea.vmem [#allocation9], %s448
        // Predicated region
        $region49: #{tpu_custom_call.1} parent=35 // pred_check
          %p450 = pneg %p167
        $region50: #{tpu_custom_call.1} parent=35 // pred_check_branch
          %452 = sbr.rel (%p450) target = $region52
        $region51: #{tpu_custom_call.1} parent=35 // pred_region
          %454 = vsyncadd %s441, 0
          %s455 = sadd.s32 %s34, %s33
          %s456 = smul.addr %s455, 8
          %s457 = scalar_lea.hbm %s4, %s456
          %s459 = sshll.u32 %s444, 4
          %s460 = int_to_ptr.vmem [resolvable:$true] %s459
          %s461 = sshll.u32 %s457, 4
          %s462 = int_to_ptr.hbm [resolvable:$true] %s461
          %464 = dma.vmem_to_hbm [thread:$0]  %s460, 128, %s462, %s441
        $region52: #{tpu_custom_call.1} parent=35 // pred_fallthru
          _
        // Predicated region
        $region53: #{tpu_custom_call.1} parent=35 // pred_check
          %p465 = pneg %p195
        $region54: #{tpu_custom_call.1} parent=35 // pred_check_branch
          %467 = sbr.rel (%p465) target = $region56
        $region55: #{tpu_custom_call.1} parent=35 // pred_region
          %469 = vsyncadd %s446, 0
          %s470 = sadd.s32 %s34, %s33
          %s471 = smul.addr %s470, 8
          %s472 = scalar_lea.hbm %s5, %s471
          %s474 = sshll.u32 %s449, 4
          %s475 = int_to_ptr.vmem [resolvable:$true] %s474
          %s476 = sshll.u32 %s472, 4
          %s477 = int_to_ptr.hbm [resolvable:$true] %s476
          %479 = dma.vmem_to_hbm [thread:$0]  %s475, 128, %s477, %s446
        $region56: #{tpu_custom_call.1} parent=35 // pred_fallthru
          _
      $region36: #{tpu_custom_call.1} parent=5 // pred_fallthru
        _
      %p480 = scmp.le.s32.totalorder 2, %s24
      // Predicated region
      $region57: #{tpu_custom_call.1} parent=5 // pred_check
        %p481 = pneg %p480
      $region58: #{tpu_custom_call.1} parent=5 // pred_check_branch
        %483 = sbr.rel (%p481) target = $region60
      $region59: #{tpu_custom_call.1} parent=5 // pred_region
        %s484 = ssub.s32 %s24, 2
        // Predicated region
        $region61: #{tpu_custom_call.1} parent=59 // pred_check
          %p485 = pneg %p173
        $region62: #{tpu_custom_call.1} parent=59 // pred_check_branch
          %487 = sbr.rel (%p485) target = $region64
        $region63: #{tpu_custom_call.1} parent=59 // pred_region
          %s488 = sand.u32 %s158, 1
          %s489 = scalar_lea.sflag [#allocation4], %s488
          %s490 = sand.u32 %s158, 1
          %s491 = smul.addr %s490, 8
          %s492 = scalar_lea.vmem [#allocation8], %s491
          %494 = dma.done %s489, 128
        $region64: #{tpu_custom_call.1} parent=59 // pred_fallthru
          _
        // Predicated region
        $region65: #{tpu_custom_call.1} parent=59 // pred_check
          %p495 = pneg %p201
        $region66: #{tpu_custom_call.1} parent=59 // pred_check_branch
          %497 = sbr.rel (%p495) target = $region68
        $region67: #{tpu_custom_call.1} parent=59 // pred_region
          %s498 = sand.u32 %s186, 1
          %s499 = scalar_lea.sflag [#allocation10], %s498
          %s500 = sand.u32 %s186, 1
          %s501 = smul.addr %s500, 8
          %s502 = scalar_lea.vmem [#allocation9], %s501
          %504 = dma.done %s499, 128
        $region68: #{tpu_custom_call.1} parent=59 // pred_fallthru
          _
      $region60: #{tpu_custom_call.1} parent=5 // pred_fallthru
        _
    $region6: #{tpu_custom_call.1} parent=1 // loop_footer
      %s28 = sadd.s32 1, %s24
    $region7: #{tpu_custom_call.1} parent=1 // loop_footer_branch
      %23 = sbr.rel target = $region3
    $region8: #{tpu_custom_call.1} parent=1 // loop_exit
      _
    %505 = vsyncpa [#allocation3], 1
    %s506 = scalar_lea.sflag [#allocation3], 1
    %507 = vsyncpa %s506, 1
    %508 = vsyncpa [#allocation6], 1
    %s509 = scalar_lea.sflag [#allocation6], 1
    %510 = vsyncpa %s509, 1
    %511 = vsyncpa [#allocation4], 1
    %s512 = scalar_lea.sflag [#allocation4], 1
    %513 = vsyncpa %s512, 1
    %514 = vsyncpa [#allocation10], 1
    %s515 = scalar_lea.sflag [#allocation10], 1
    %516 = vsyncpa %s515, 1

</llo_original>
